<compile_context>
chip_gen: v6e
topology: v6e:2x2x1
jax: 0.10.0
libtpu: 0.0.40
codegen_flags: <defaults>
</compile_context>

<pallas_src>
import functools

import jax
import jax.numpy as jnp
from jax.experimental import pallas as pl
from jax.experimental.pallas import tpu as pltpu


def _round_up(x, m):
    return -(-x // m) * m


@functools.lru_cache(maxsize=1)
def _chip_config():
    """Static per-process hardware facts used for tiling / dtype decisions."""
    kind = ""
    try:
        kind = jax.devices()[0].device_kind.lower()
    except Exception:
        pass
    is_v7 = ("v7" in kind) or ("tpu7" in kind)
    is_v6 = "v6" in kind
    is_v5e = ("v5e" in kind) or ("v5 lite" in kind) or ("v5lite" in kind)
    try:
        vmem_cap = int(pltpu.get_tpu_info().vmem_capacity_bytes)
    except Exception:
        vmem_cap = (64 << 20) if is_v7 else (128 << 20)
    return {
        # ~16 MiB pred block on 128 MiB v5e/v6e, ~8 MiB on 64 MiB/TC v7x
        "block_budget": max(4 << 20, vmem_cap // 8),
        # leave Mosaic-internal scratch headroom (44.8 MiB cap on v7x, ~90 MiB on v5e/v6e)
        "vmem_limit_cap": max(32 << 20, int(0.7 * vmem_cap)),
        # HBM-bound generations default to shipping pred as bf16
        "auto_pred_bf16": bool(is_v5e or is_v6),
        # native bf16 VPU (v6e / v7x); v5e must keep the pass-1 max in f32
        "bf16_vpu": bool(is_v6 or is_v7),
    }


def _pick_tiling(L, C, pred_itemsize, block_budget):
    """All static Python ints.  Returns (Lr, Lc, TR, TL, n_row_tiles, n_lane_tiles)."""
    Lc = _round_up(L, 128)                 # lane padding: multiple of 128 only
    TL = 128                               # lane tile: largest <=512 multiple-of-128 divisor of Lc
    for cand in (512, 384, 256, 128):
        if Lc % cand == 0:
            TL = cand
            break
    Lr = _round_up(L, 16)                  # row padding: 16 => an even row-tile count always exists
    n8 = Lr // 8
    TR, nr = 8, n8                         # fallback: minimal row tile
    for nt in range(2, n8 + 1, 2):         # smallest even tile count whose pred block fits budget
        if n8 % nt:
            continue
        tr = 8 * (n8 // nt)
        if C * tr * TL * pred_itemsize <= block_budget:
            TR, nr = tr, nt
            break
    return Lr, Lc, TR, TL, nr, Lc // TL


def _make_kernel(C, TR, TL, long_length, bf16_pass1):
    """long_length is a static Python int (None/0 disables weighting, like PyTorch's falsy check)."""
    n_chunks = TR // 8
    n_groups = TL // 128

    def kernel(cw_ref, pred_ref, label_ref, mask_ref, out_ref):
        row0 = pl.program_id(0) * TR
        col0 = pl.program_id(1) * TL

        # Hoist the SMEM scalar reads (class_weight - 1) out of the chunk loop.
        add_wc = [cw_ref[c] - 1.0 for c in range(C)] if long_length else None

        def chunk(k, acc):
            r = pl.multiple_of(k * 8, 8)
            rows = pl.ds(r, 8)

            label = label_ref[rows, :].astype(jnp.int32)       # (8, TL)
            maskf = mask_ref[rows, :].astype(jnp.float32)      # (8, TL)

            # ---- pass 1: running max over the class axis (vreg-resident). ----
            if bf16_pass1:
                m = pred_ref[0, rows, :]
                for c in range(1, C):
                    m = jnp.maximum(m, pred_ref[c, rows, :])
                m = m.astype(jnp.float32)
            else:
                m = pred_ref[0, rows, :].astype(jnp.float32)
                for c in range(1, C):
                    m = jnp.maximum(m, pred_ref[c, rows, :].astype(jnp.float32))

            # ---- pass 2: sum of exp + picked logit (+ per-label extra weight). ----
            sumexp = jnp.zeros((8, TL), jnp.float32)
            picked = jnp.zeros((8, TL), jnp.float32)
            add_w = jnp.zeros((8, TL), jnp.float32) if long_length else None
            for c in range(C):
                x = pred_ref[c, rows, :].astype(jnp.float32)
                sumexp = sumexp + jnp.exp(x - m)
                sel = label == c
                picked = jnp.where(sel, x, picked)
                if long_length:
                    add_w = jnp.where(sel, add_wc[c], add_w)

            # per-pixel cross entropy: logsumexp_c(pred) - pred[label]
            loss = jnp.log(sumexp) + m - picked                 # (8, TL)

            if long_length:
                row = jax.lax.broadcasted_iota(jnp.int32, (8, TL), 0) + (row0 + r)
                col = jax.lax.broadcasted_iota(jnp.int32, (8, TL), 1) + col0
                trunc = (jnp.abs(row - col) >= long_length).astype(jnp.float32)
                maskf = (1.0 + add_w * trunc) * maskf

            return acc + loss * maskf

        acc = jax.lax.fori_loop(0, n_chunks, chunk, jnp.zeros((8, TL), jnp.float32))

        # Fold the lane dim down to 128 with vreg-aligned adds (no cross-lane XLU reduce,
        # no scalar broadcast); the wrapper sums the tiny (nr, nl, 8, 128) output.
        folded = acc[:, 0:128]
        for g in range(1, n_groups):
            folded = folded + acc[:, g * 128:(g + 1) * 128]
        out_ref[...] = folded

    return kernel


@functools.partial(
    jax.jit,
    static_argnames=("long_length", "pred_bf16", "bf16_pass1",
                     "block_budget", "vmem_limit_cap"))
def _masked_cross_entropy_impl(pred, label, mask, class_weight, *,
                               long_length, pred_bf16, bf16_pass1,
                               block_budget, vmem_limit_cap):
    C = pred.shape[1]
    L = pred.shape[2]

    pdtype = jnp.bfloat16 if pred_bf16 else jnp.float32
    lab_dtype = jnp.int8 if C <= 127 else jnp.int32        # int8 only when class ids fit

    p = pred[0].astype(pdtype)                  # (C, L, L)
    lab = label[0].astype(lab_dtype)            # (L, L)
    msk = mask[0].astype(jnp.int8)              # (L, L)
    cw = jnp.asarray(class_weight, jnp.float32).reshape(C)

    itemsize = jnp.dtype(pdtype).itemsize
    Lr, Lc, TR, TL, nr, nl = _pick_tiling(L, C, itemsize, block_budget)

    if Lr != L or Lc != L:
        # Zero padding keeps padded logits finite; padded pixels carry mask == 0, so they
        # contribute nothing, and the final division uses the original L**2.
        p = jnp.pad(p, ((0, 0), (0, Lr - L), (0, Lc - L)))
        lab = jnp.pad(lab, ((0, Lr - L), (0, Lc - L)))
        msk = jnp.pad(msk, ((0, Lr - L), (0, Lc - L)))

    # Double-buffered I/O blocks + headroom for Mosaic scratch, capped per generation.
    blk_bytes = (C * TR * TL * itemsize
                 + TR * TL * (jnp.dtype(lab_dtype).itemsize + 1)
                 + 8 * 128 * 4)
    vmem_limit = int(min(vmem_limit_cap, max(32 << 20, 2 * blk_bytes + (6 << 20))))

    kernel = _make_kernel(C, TR, TL, long_length, bf16_pass1)

    out = pl.pallas_call(
        kernel,
        out_shape=jax.ShapeDtypeStruct((nr, nl, 8, 128), jnp.float32),
        grid=(nr, nl),
        in_specs=[
            pl.BlockSpec(memory_space=pltpu.MemorySpace.SMEM),       # class_weight (C,)
            pl.BlockSpec((C, TR, TL), lambda i, j: (0, i, j)),       # pred (class-major)
            pl.BlockSpec((TR, TL), lambda i, j: (i, j)),             # label
            pl.BlockSpec((TR, TL), lambda i, j: (i, j)),             # mask
        ],
        out_specs=pl.BlockSpec((None, None, 8, 128), lambda i, j: (i, j, 0, 0)),
        compiler_params=pltpu.CompilerParams(
            dimension_semantics=("parallel", "parallel"),
            vmem_limit_bytes=vmem_limit,
        ),
    )(cw, p, lab, msk)

    return jnp.sum(out) / jnp.float32(L * L)


def masked_cross_entropy(pred, label, mask, class_weight, *, long_length, pred_bf16=None):
    """pred: (1, C, L, L); label: (1, L, L) int; mask: (1, L, L) bool.  Returns scalar loss.

    pred_bf16=None auto-enables bf16 pred shipping on the HBM-bound v5e/v6e generations
    (f32 elsewhere); the bf16 pass-1 max is used only on chips with a bf16 VPU (v6e/v7x).
    """
    cfg = _chip_config()
    if pred_bf16 is None:
        pred_bf16 = cfg["auto_pred_bf16"]
    pred_bf16 = bool(pred_bf16)
    bf16_pass1 = bool(pred_bf16 and cfg["bf16_vpu"])
    return _masked_cross_entropy_impl(
        pred, label, mask, class_weight,
        long_length=long_length, pred_bf16=pred_bf16, bf16_pass1=bf16_pass1,
        block_budget=int(cfg["block_budget"]),
        vmem_limit_cap=int(cfg["vmem_limit_cap"]))


def _reference(pred, label, mask, class_weight, long_length):
    """Pure-JAX re-implementation of the PyTorch forward for verification."""
    logp = jax.nn.log_softmax(pred.astype(jnp.float32), axis=1)              # (1, C, L, L)
    loss = -jnp.take_along_axis(logp, label[:, None, :, :], axis=1)[:, 0]    # (1, L, L)
    m = mask.shape[1]
    if long_length:
        idx = jnp.arange(m)
        trunc = (jnp.abs(idx[:, None] - idx[None, :]) >= long_length).astype(jnp.float32)[None]
        cw = jnp.asarray(class_weight, jnp.float32)
        weight = 1.0 + (cw[label] - 1.0) * trunc
        maskf = weight * mask.astype(jnp.float32)
    else:
        maskf = mask.astype(jnp.float32)
    return jnp.sum(loss * maskf) / (m * m)


if __name__ == "__main__":
    key = jax.random.PRNGKey(0)
    k1, k2, k3, k4, k5, k6 = jax.random.split(key, 6)

    C = 10
    class_weight = jnp.asarray(
        [1.0, 2.0, 1.5, 0.5, 3.0, 1.0, 2.5, 0.75, 1.25, 2.0], jnp.float32)

    # --- small image (2 row tiles of 8, single 128-lane tile), long_length weighting on ---
    L = 16
    long_length = 4
    pred = jax.random.normal(k1, (1, C, L, L), dtype=jnp.float32)
    label = jax.random.randint(k2, (1, L, L), 0, C, dtype=jnp.int32)
    mask = jax.random.bernoulli(k3, 0.7, (1, L, L))

    out = jax.block_until_ready(masked_cross_entropy(
        pred, label, mask, class_weight, long_length=long_length, pred_bf16=False))
    ref = _reference(pred, label, mask, class_weight, long_length)
    assert jnp.allclose(out, ref, rtol=1e-4, atol=1e-4), (out, ref)

    # --- long_length disabled (weighting branch skipped; matches PyTorch's falsy check) ---
    out_nl = jax.block_until_ready(masked_cross_entropy(
        pred, label, mask, class_weight, long_length=None, pred_bf16=False))
    ref_nl = _reference(pred, label, mask, class_weight, None)
    assert jnp.allclose(out_nl, ref_nl, rtol=1e-4, atol=1e-4), (out_nl, ref_nl)

    # --- explicit bf16 pred path (halved HBM traffic); compare vs bf16-rounded reference ---
    out_bf = jax.block_until_ready(masked_cross_entropy(
        pred, label, mask, class_weight, long_length=long_length, pred_bf16=True))
    ref_bf = _reference(pred.astype(jnp.bfloat16).astype(jnp.float32),
                        label, mask, class_weight, long_length)
    assert jnp.allclose(out_bf, ref_bf, rtol=1e-3, atol=1e-3), (out_bf, ref_bf)

    # --- auto per-chip dtype selection (bf16 on v5e/v6e, f32 otherwise) ---
    auto_bf16 = _chip_config()["auto_pred_bf16"]
    out_auto = jax.block_until_ready(masked_cross_entropy(
        pred, label, mask, class_weight, long_length=long_length))
    ref_auto = ref_bf if auto_bf16 else ref
    assert jnp.allclose(out_auto, ref_auto, rtol=1e-3, atol=1e-3), (out_auto, ref_auto)

    # --- larger, non-aligned image: decoupled row/lane padding (304 x 384), 2 even row
    #     tiles, in-kernel (8, TL) chunking with vreg-resident accumulators ---
    L2 = 300
    long_length2 = 24
    pred2 = jax.random.normal(k4, (1, C, L2, L2), dtype=jnp.float32)
    label2 = jax.random.randint(k5, (1, L2, L2), 0, C, dtype=jnp.int32)
    mask2 = jax.random.bernoulli(k6, 0.7, (1, L2, L2))

    out2 = jax.block_until_ready(masked_cross_entropy(
        pred2, label2, mask2, class_weight, long_length=long_length2, pred_bf16=False))
    ref2 = _reference(pred2, label2, mask2, class_weight, long_length2)
    assert jnp.allclose(out2, ref2, rtol=5e-4, atol=1e-3), (out2, ref2)

    print("KERNEL_OK")
</pallas_src>

<mosaic_0001>
module attributes {stable_mosaic.version = 11 : i64} {
  func.func @kernel(%arg0: i32, %arg1: i32, %arg2: memref<10xf32, #tpu.memory_space<smem>>, %arg3: memref<10x8x128xf32, #tpu.memory_space<vmem>>, %arg4: memref<8x128xi8, #tpu.memory_space<vmem>>, %arg5: memref<8x128xi8, #tpu.memory_space<vmem>>, %arg6: memref<1x1x8x128xf32, #tpu.memory_space<vmem>>) attributes {dimension_semantics = [#tpu.dimension_semantics<parallel>, #tpu.dimension_semantics<parallel>], iteration_bounds = array<i64: 2, 1>, scalar_prefetch = 0 : i64, scratch_operands = 0 : i64, tpu.core_type = #tpu.core_type<tc>, window_params = [{transform_indices = @transform_0, window_bounds = array<i64: 10>}, {transform_indices = @transform_1, window_bounds = array<i64: 10, 8, 128>}, {transform_indices = @transform_2, window_bounds = array<i64: 8, 128>}, {transform_indices = @transform_3, window_bounds = array<i64: 8, 128>}, {transform_indices = @transform_4, window_bounds = array<i64: 1, 1, 8, 128>}]} {
    %c8_i32 = arith.constant 8 : i32
    %0 = arith.muli %arg0, %c8_i32 : i32
    %c128_i32 = arith.constant 128 : i32
    %1 = arith.muli %arg1, %c128_i32 : i32
    %c0 = arith.constant 0 : index
    %2 = memref.load %arg2[%c0] : memref<10xf32, #tpu.memory_space<smem>>
    %cst = arith.constant 1.000000e+00 : f32
    %3 = arith.subf %2, %cst : f32
    %c1 = arith.constant 1 : index
    %4 = memref.load %arg2[%c1] : memref<10xf32, #tpu.memory_space<smem>>
    %cst_0 = arith.constant 1.000000e+00 : f32
    %5 = arith.subf %4, %cst_0 : f32
    %c2 = arith.constant 2 : index
    %6 = memref.load %arg2[%c2] : memref<10xf32, #tpu.memory_space<smem>>
    %cst_1 = arith.constant 1.000000e+00 : f32
    %7 = arith.subf %6, %cst_1 : f32
    %c3 = arith.constant 3 : index
    %8 = memref.load %arg2[%c3] : memref<10xf32, #tpu.memory_space<smem>>
    %cst_2 = arith.constant 1.000000e+00 : f32
    %9 = arith.subf %8, %cst_2 : f32
    %c4 = arith.constant 4 : index
    %10 = memref.load %arg2[%c4] : memref<10xf32, #tpu.memory_space<smem>>
    %cst_3 = arith.constant 1.000000e+00 : f32
    %11 = arith.subf %10, %cst_3 : f32
    %c5 = arith.constant 5 : index
    %12 = memref.load %arg2[%c5] : memref<10xf32, #tpu.memory_space<smem>>
    %cst_4 = arith.constant 1.000000e+00 : f32
    %13 = arith.subf %12, %cst_4 : f32
    %c6 = arith.constant 6 : index
    %14 = memref.load %arg2[%c6] : memref<10xf32, #tpu.memory_space<smem>>
    %cst_5 = arith.constant 1.000000e+00 : f32
    %15 = arith.subf %14, %cst_5 : f32
    %c7 = arith.constant 7 : index
    %16 = memref.load %arg2[%c7] : memref<10xf32, #tpu.memory_space<smem>>
    %cst_6 = arith.constant 1.000000e+00 : f32
    %17 = arith.subf %16, %cst_6 : f32
    %c8 = arith.constant 8 : index
    %18 = memref.load %arg2[%c8] : memref<10xf32, #tpu.memory_space<smem>>
    %cst_7 = arith.constant 1.000000e+00 : f32
    %19 = arith.subf %18, %cst_7 : f32
    %c9 = arith.constant 9 : index
    %20 = memref.load %arg2[%c9] : memref<10xf32, #tpu.memory_space<smem>>
    %cst_8 = arith.constant 1.000000e+00 : f32
    %21 = arith.subf %20, %cst_8 : f32
    %cst_9 = arith.constant 0.000000e+00 : f32
    %22 = vector.broadcast %cst_9 : f32 to vector<8x128xf32>
    %c0_i32 = arith.constant 0 : i32
    %c8_i32_10 = arith.constant 8 : i32
    %23 = arith.muli %c0_i32, %c8_i32_10 : i32
    %24 = tpu.assume_multiple %23, 8 : i32
    %25 = arith.index_cast %24 : i32 to index
    %c0_11 = arith.constant 0 : index
    %26 = vector.load %arg4[%25, %c0_11] : memref<8x128xi8, #tpu.memory_space<vmem>>, vector<8x128xi8>
    %27 = arith.extsi %26 : vector<8x128xi8> to vector<8x128xi32>
    %28 = arith.index_cast %24 : i32 to index
    %c0_12 = arith.constant 0 : index
    %29 = vector.load %arg5[%28, %c0_12] : memref<8x128xi8, #tpu.memory_space<vmem>>, vector<8x128xi8>
    %30 = arith.sitofp %29 : vector<8x128xi8> to vector<8x128xf32>
    %c0_13 = arith.constant 0 : index
    %31 = arith.index_cast %24 : i32 to index
    %c0_14 = arith.constant 0 : index
    %32 = vector.load %arg3[%c0_13, %31, %c0_14] : memref<10x8x128xf32, #tpu.memory_space<vmem>>, vector<1x8x128xf32>
    %33 = vector.shape_cast %32 : vector<1x8x128xf32> to vector<8x128xf32>
    %c1_15 = arith.constant 1 : index
    %34 = arith.index_cast %24 : i32 to index
    %c0_16 = arith.constant 0 : index
    %35 = vector.load %arg3[%c1_15, %34, %c0_16] : memref<10x8x128xf32, #tpu.memory_space<vmem>>, vector<1x8x128xf32>
    %36 = vector.shape_cast %35 : vector<1x8x128xf32> to vector<8x128xf32>
    %37 = arith.maximumf %33, %36 : vector<8x128xf32>
    %c2_17 = arith.constant 2 : index
    %38 = arith.index_cast %24 : i32 to index
    %c0_18 = arith.constant 0 : index
    %39 = vector.load %arg3[%c2_17, %38, %c0_18] : memref<10x8x128xf32, #tpu.memory_space<vmem>>, vector<1x8x128xf32>
    %40 = vector.shape_cast %39 : vector<1x8x128xf32> to vector<8x128xf32>
    %41 = arith.maximumf %37, %40 : vector<8x128xf32>
    %c3_19 = arith.constant 3 : index
    %42 = arith.index_cast %24 : i32 to index
    %c0_20 = arith.constant 0 : index
    %43 = vector.load %arg3[%c3_19, %42, %c0_20] : memref<10x8x128xf32, #tpu.memory_space<vmem>>, vector<1x8x128xf32>
    %44 = vector.shape_cast %43 : vector<1x8x128xf32> to vector<8x128xf32>
    %45 = arith.maximumf %41, %44 : vector<8x128xf32>
    %c4_21 = arith.constant 4 : index
    %46 = arith.index_cast %24 : i32 to index
    %c0_22 = arith.constant 0 : index
    %47 = vector.load %arg3[%c4_21, %46, %c0_22] : memref<10x8x128xf32, #tpu.memory_space<vmem>>, vector<1x8x128xf32>
    %48 = vector.shape_cast %47 : vector<1x8x128xf32> to vector<8x128xf32>
    %49 = arith.maximumf %45, %48 : vector<8x128xf32>
    %c5_23 = arith.constant 5 : index
    %50 = arith.index_cast %24 : i32 to index
    %c0_24 = arith.constant 0 : index
    %51 = vector.load %arg3[%c5_23, %50, %c0_24] : memref<10x8x128xf32, #tpu.memory_space<vmem>>, vector<1x8x128xf32>
    %52 = vector.shape_cast %51 : vector<1x8x128xf32> to vector<8x128xf32>
    %53 = arith.maximumf %49, %52 : vector<8x128xf32>
    %c6_25 = arith.constant 6 : index
    %54 = arith.index_cast %24 : i32 to index
    %c0_26 = arith.constant 0 : index
    %55 = vector.load %arg3[%c6_25, %54, %c0_26] : memref<10x8x128xf32, #tpu.memory_space<vmem>>, vector<1x8x128xf32>
    %56 = vector.shape_cast %55 : vector<1x8x128xf32> to vector<8x128xf32>
    %57 = arith.maximumf %53, %56 : vector<8x128xf32>
    %c7_27 = arith.constant 7 : index
    %58 = arith.index_cast %24 : i32 to index
    %c0_28 = arith.constant 0 : index
    %59 = vector.load %arg3[%c7_27, %58, %c0_28] : memref<10x8x128xf32, #tpu.memory_space<vmem>>, vector<1x8x128xf32>
    %60 = vector.shape_cast %59 : vector<1x8x128xf32> to vector<8x128xf32>
    %61 = arith.maximumf %57, %60 : vector<8x128xf32>
    %c8_29 = arith.constant 8 : index
    %62 = arith.index_cast %24 : i32 to index
    %c0_30 = arith.constant 0 : index
    %63 = vector.load %arg3[%c8_29, %62, %c0_30] : memref<10x8x128xf32, #tpu.memory_space<vmem>>, vector<1x8x128xf32>
    %64 = vector.shape_cast %63 : vector<1x8x128xf32> to vector<8x128xf32>
    %65 = arith.maximumf %61, %64 : vector<8x128xf32>
    %c9_31 = arith.constant 9 : index
    %66 = arith.index_cast %24 : i32 to index
    %c0_32 = arith.constant 0 : index
    %67 = vector.load %arg3[%c9_31, %66, %c0_32] : memref<10x8x128xf32, #tpu.memory_space<vmem>>, vector<1x8x128xf32>
    %68 = vector.shape_cast %67 : vector<1x8x128xf32> to vector<8x128xf32>
    %69 = arith.maximumf %65, %68 : vector<8x128xf32>
    %cst_33 = arith.constant 0.000000e+00 : f32
    %70 = vector.broadcast %cst_33 : f32 to vector<8x128xf32>
    %cst_34 = arith.constant 0.000000e+00 : f32
    %71 = vector.broadcast %cst_34 : f32 to vector<8x128xf32>
    %cst_35 = arith.constant 0.000000e+00 : f32
    %72 = vector.broadcast %cst_35 : f32 to vector<8x128xf32>
    %c0_36 = arith.constant 0 : index
    %73 = arith.index_cast %24 : i32 to index
    %c0_37 = arith.constant 0 : index
    %74 = vector.load %arg3[%c0_36, %73, %c0_37] : memref<10x8x128xf32, #tpu.memory_space<vmem>>, vector<1x8x128xf32>
    %75 = vector.shape_cast %74 : vector<1x8x128xf32> to vector<8x128xf32>
    %76 = arith.subf %75, %69 : vector<8x128xf32>
    %77 = math.exp %76 : vector<8x128xf32>
    %78 = arith.addf %70, %77 : vector<8x128xf32>
    %c0_i32_38 = arith.constant 0 : i32
    %79 = vector.broadcast %c0_i32_38 : i32 to vector<8x128xi32>
    %80 = arith.cmpi eq, %27, %79 : vector<8x128xi32>
    %81 = arith.select %80, %75, %71 : vector<8x128xi1>, vector<8x128xf32>
    %82 = vector.broadcast %3 : f32 to vector<8x128xf32>
    %83 = arith.select %80, %82, %72 : vector<8x128xi1>, vector<8x128xf32>
    %c1_39 = arith.constant 1 : index
    %84 = arith.index_cast %24 : i32 to index
    %c0_40 = arith.constant 0 : index
    %85 = vector.load %arg3[%c1_39, %84, %c0_40] : memref<10x8x128xf32, #tpu.memory_space<vmem>>, vector<1x8x128xf32>
    %86 = vector.shape_cast %85 : vector<1x8x128xf32> to vector<8x128xf32>
    %87 = arith.subf %86, %69 : vector<8x128xf32>
    %88 = math.exp %87 : vector<8x128xf32>
    %89 = arith.addf %78, %88 : vector<8x128xf32>
    %c1_i32 = arith.constant 1 : i32
    %90 = vector.broadcast %c1_i32 : i32 to vector<8x128xi32>
    %91 = arith.cmpi eq, %27, %90 : vector<8x128xi32>
    %92 = arith.select %91, %86, %81 : vector<8x128xi1>, vector<8x128xf32>
    %93 = vector.broadcast %5 : f32 to vector<8x128xf32>
    %94 = arith.select %91, %93, %83 : vector<8x128xi1>, vector<8x128xf32>
    %c2_41 = arith.constant 2 : index
    %95 = arith.index_cast %24 : i32 to index
    %c0_42 = arith.constant 0 : index
    %96 = vector.load %arg3[%c2_41, %95, %c0_42] : memref<10x8x128xf32, #tpu.memory_space<vmem>>, vector<1x8x128xf32>
    %97 = vector.shape_cast %96 : vector<1x8x128xf32> to vector<8x128xf32>
    %98 = arith.subf %97, %69 : vector<8x128xf32>
    %99 = math.exp %98 : vector<8x128xf32>
    %100 = arith.addf %89, %99 : vector<8x128xf32>
    %c2_i32 = arith.constant 2 : i32
    %101 = vector.broadcast %c2_i32 : i32 to vector<8x128xi32>
    %102 = arith.cmpi eq, %27, %101 : vector<8x128xi32>
    %103 = arith.select %102, %97, %92 : vector<8x128xi1>, vector<8x128xf32>
    %104 = vector.broadcast %7 : f32 to vector<8x128xf32>
    %105 = arith.select %102, %104, %94 : vector<8x128xi1>, vector<8x128xf32>
    %c3_43 = arith.constant 3 : index
    %106 = arith.index_cast %24 : i32 to index
    %c0_44 = arith.constant 0 : index
    %107 = vector.load %arg3[%c3_43, %106, %c0_44] : memref<10x8x128xf32, #tpu.memory_space<vmem>>, vector<1x8x128xf32>
    %108 = vector.shape_cast %107 : vector<1x8x128xf32> to vector<8x128xf32>
    %109 = arith.subf %108, %69 : vector<8x128xf32>
    %110 = math.exp %109 : vector<8x128xf32>
    %111 = arith.addf %100, %110 : vector<8x128xf32>
    %c3_i32 = arith.constant 3 : i32
    %112 = vector.broadcast %c3_i32 : i32 to vector<8x128xi32>
    %113 = arith.cmpi eq, %27, %112 : vector<8x128xi32>
    %114 = arith.select %113, %108, %103 : vector<8x128xi1>, vector<8x128xf32>
    %115 = vector.broadcast %9 : f32 to vector<8x128xf32>
    %116 = arith.select %113, %115, %105 : vector<8x128xi1>, vector<8x128xf32>
    %c4_45 = arith.constant 4 : index
    %117 = arith.index_cast %24 : i32 to index
    %c0_46 = arith.constant 0 : index
    %118 = vector.load %arg3[%c4_45, %117, %c0_46] : memref<10x8x128xf32, #tpu.memory_space<vmem>>, vector<1x8x128xf32>
    %119 = vector.shape_cast %118 : vector<1x8x128xf32> to vector<8x128xf32>
    %120 = arith.subf %119, %69 : vector<8x128xf32>
    %121 = math.exp %120 : vector<8x128xf32>
    %122 = arith.addf %111, %121 : vector<8x128xf32>
    %c4_i32 = arith.constant 4 : i32
    %123 = vector.broadcast %c4_i32 : i32 to vector<8x128xi32>
    %124 = arith.cmpi eq, %27, %123 : vector<8x128xi32>
    %125 = arith.select %124, %119, %114 : vector<8x128xi1>, vector<8x128xf32>
    %126 = vector.broadcast %11 : f32 to vector<8x128xf32>
    %127 = arith.select %124, %126, %116 : vector<8x128xi1>, vector<8x128xf32>
    %c5_47 = arith.constant 5 : index
    %128 = arith.index_cast %24 : i32 to index
    %c0_48 = arith.constant 0 : index
    %129 = vector.load %arg3[%c5_47, %128, %c0_48] : memref<10x8x128xf32, #tpu.memory_space<vmem>>, vector<1x8x128xf32>
    %130 = vector.shape_cast %129 : vector<1x8x128xf32> to vector<8x128xf32>
    %131 = arith.subf %130, %69 : vector<8x128xf32>
    %132 = math.exp %131 : vector<8x128xf32>
    %133 = arith.addf %122, %132 : vector<8x128xf32>
    %c5_i32 = arith.constant 5 : i32
    %134 = vector.broadcast %c5_i32 : i32 to vector<8x128xi32>
    %135 = arith.cmpi eq, %27, %134 : vector<8x128xi32>
    %136 = arith.select %135, %130, %125 : vector<8x128xi1>, vector<8x128xf32>
    %137 = vector.broadcast %13 : f32 to vector<8x128xf32>
    %138 = arith.select %135, %137, %127 : vector<8x128xi1>, vector<8x128xf32>
    %c6_49 = arith.constant 6 : index
    %139 = arith.index_cast %24 : i32 to index
    %c0_50 = arith.constant 0 : index
    %140 = vector.load %arg3[%c6_49, %139, %c0_50] : memref<10x8x128xf32, #tpu.memory_space<vmem>>, vector<1x8x128xf32>
    %141 = vector.shape_cast %140 : vector<1x8x128xf32> to vector<8x128xf32>
    %142 = arith.subf %141, %69 : vector<8x128xf32>
    %143 = math.exp %142 : vector<8x128xf32>
    %144 = arith.addf %133, %143 : vector<8x128xf32>
    %c6_i32 = arith.constant 6 : i32
    %145 = vector.broadcast %c6_i32 : i32 to vector<8x128xi32>
    %146 = arith.cmpi eq, %27, %145 : vector<8x128xi32>
    %147 = arith.select %146, %141, %136 : vector<8x128xi1>, vector<8x128xf32>
    %148 = vector.broadcast %15 : f32 to vector<8x128xf32>
    %149 = arith.select %146, %148, %138 : vector<8x128xi1>, vector<8x128xf32>
    %c7_51 = arith.constant 7 : index
    %150 = arith.index_cast %24 : i32 to index
    %c0_52 = arith.constant 0 : index
    %151 = vector.load %arg3[%c7_51, %150, %c0_52] : memref<10x8x128xf32, #tpu.memory_space<vmem>>, vector<1x8x128xf32>
    %152 = vector.shape_cast %151 : vector<1x8x128xf32> to vector<8x128xf32>
    %153 = arith.subf %152, %69 : vector<8x128xf32>
    %154 = math.exp %153 : vector<8x128xf32>
    %155 = arith.addf %144, %154 : vector<8x128xf32>
    %c7_i32 = arith.constant 7 : i32
    %156 = vector.broadcast %c7_i32 : i32 to vector<8x128xi32>
    %157 = arith.cmpi eq, %27, %156 : vector<8x128xi32>
    %158 = arith.select %157, %152, %147 : vector<8x128xi1>, vector<8x128xf32>
    %159 = vector.broadcast %17 : f32 to vector<8x128xf32>
    %160 = arith.select %157, %159, %149 : vector<8x128xi1>, vector<8x128xf32>
    %c8_53 = arith.constant 8 : index
    %161 = arith.index_cast %24 : i32 to index
    %c0_54 = arith.constant 0 : index
    %162 = vector.load %arg3[%c8_53, %161, %c0_54] : memref<10x8x128xf32, #tpu.memory_space<vmem>>, vector<1x8x128xf32>
    %163 = vector.shape_cast %162 : vector<1x8x128xf32> to vector<8x128xf32>
    %164 = arith.subf %163, %69 : vector<8x128xf32>
    %165 = math.exp %164 : vector<8x128xf32>
    %166 = arith.addf %155, %165 : vector<8x128xf32>
    %c8_i32_55 = arith.constant 8 : i32
    %167 = vector.broadcast %c8_i32_55 : i32 to vector<8x128xi32>
    %168 = arith.cmpi eq, %27, %167 : vector<8x128xi32>
    %169 = arith.select %168, %163, %158 : vector<8x128xi1>, vector<8x128xf32>
    %170 = vector.broadcast %19 : f32 to vector<8x128xf32>
    %171 = arith.select %168, %170, %160 : vector<8x128xi1>, vector<8x128xf32>
    %c9_56 = arith.constant 9 : index
    %172 = arith.index_cast %24 : i32 to index
    %c0_57 = arith.constant 0 : index
    %173 = vector.load %arg3[%c9_56, %172, %c0_57] : memref<10x8x128xf32, #tpu.memory_space<vmem>>, vector<1x8x128xf32>
    %174 = vector.shape_cast %173 : vector<1x8x128xf32> to vector<8x128xf32>
    %175 = arith.subf %174, %69 : vector<8x128xf32>
    %176 = math.exp %175 : vector<8x128xf32>
    %177 = arith.addf %166, %176 : vector<8x128xf32>
    %c9_i32 = arith.constant 9 : i32
    %178 = vector.broadcast %c9_i32 : i32 to vector<8x128xi32>
    %179 = arith.cmpi eq, %27, %178 : vector<8x128xi32>
    %180 = arith.select %179, %174, %169 : vector<8x128xi1>, vector<8x128xf32>
    %181 = vector.broadcast %21 : f32 to vector<8x128xf32>
    %182 = arith.select %179, %181, %171 : vector<8x128xi1>, vector<8x128xf32>
    %183 = math.log %177 : vector<8x128xf32>
    %184 = arith.addf %183, %69 : vector<8x128xf32>
    %185 = arith.subf %184, %180 : vector<8x128xf32>
    %186 = tpu.iota {dimensions = array<i32: 0>} : vector<8x128xi32>
    %187 = arith.addi %0, %24 : i32
    %188 = vector.broadcast %187 : i32 to vector<8x128xi32>
    %189 = arith.addi %186, %188 : vector<8x128xi32>
    %190 = tpu.iota {dimensions = array<i32: 1>} : vector<8x128xi32>
    %191 = vector.broadcast %1 : i32 to vector<8x128xi32>
    %192 = arith.addi %190, %191 : vector<8x128xi32>
    %193 = arith.subi %189, %192 : vector<8x128xi32>
    %194 = math.absi %193 : vector<8x128xi32>
    %c4_i32_58 = arith.constant 4 : i32
    %195 = vector.broadcast %c4_i32_58 : i32 to vector<8x128xi32>
    %196 = arith.cmpi sge, %194, %195 : vector<8x128xi32>
    %197 = arith.extui %196 : vector<8x128xi1> to vector<8x128xi32>
    %198 = arith.sitofp %197 : vector<8x128xi32> to vector<8x128xf32>
    %199 = arith.mulf %182, %198 : vector<8x128xf32>
    %cst_59 = arith.constant 1.000000e+00 : f32
    %200 = vector.broadcast %cst_59 : f32 to vector<8x128xf32>
    %201 = arith.addf %200, %199 : vector<8x128xf32>
    %202 = arith.mulf %201, %30 : vector<8x128xf32>
    %203 = arith.mulf %185, %202 : vector<8x128xf32>
    %204 = arith.addf %22, %203 : vector<8x128xf32>
    %c1_i32_60 = arith.constant 1 : i32
    %c0_61 = arith.constant 0 : index
    %c0_62 = arith.constant 0 : index
    %c0_63 = arith.constant 0 : index
    %c0_64 = arith.constant 0 : index
    %205 = vector.load %arg6[%c0_61, %c0_62, %c0_63, %c0_64] : memref<1x1x8x128xf32, #tpu.memory_space<vmem>>, vector<1x1x8x128xf32>
    %206 = vector.shape_cast %205 : vector<1x1x8x128xf32> to vector<8x128xf32>
    %207 = vector.shape_cast %204 : vector<8x128xf32> to vector<1x1x8x128xf32>
    tpu.vector_store %arg6[%c0_61, %c0_62, %c0_63, %c0_64], %207 {strides = array<i32>} : memref<1x1x8x128xf32, #tpu.memory_space<vmem>>, vector<1x1x8x128xf32>,
    return
  }
  func.func @transform_0(%arg0: i32, %arg1: i32) -> i32 {
    %c0_i32 = arith.constant 0 : i32
    %c0_i32_0 = arith.constant 0 : i32
    return %c0_i32 : i32
  }
  func.func @transform_1(%arg0: i32, %arg1: i32) -> (i32, i32, i32) {
    %c0_i32 = arith.constant 0 : i32
    %c0_i32_0 = arith.constant 0 : i32
    return %c0_i32, %arg0, %arg1 : i32, i32, i32
  }
  func.func @transform_2(%arg0: i32, %arg1: i32) -> (i32, i32) {
    %c0_i32 = arith.constant 0 : i32
    return %arg0, %arg1 : i32, i32
  }
  func.func @transform_3(%arg0: i32, %arg1: i32) -> (i32, i32) {
    %c0_i32 = arith.constant 0 : i32
    return %arg0, %arg1 : i32, i32
  }
  func.func @transform_4(%arg0: i32, %arg1: i32) -> (i32, i32, i32, i32) {
    %c0_i32 = arith.constant 0 : i32
    %c0_i32_0 = arith.constant 0 : i32
    %c0_i32_1 = arith.constant 0 : i32
    return %arg0, %arg1, %c0_i32, %c0_i32_0 : i32, i32, i32, i32
  }
}

</mosaic_0001>

<llo_original>
// kernel: _masked_cross_entropy_impl.1
$region0: #{_masked_cross_entropy_impl.1}
  #allocation0 [shape = 'u32[]', space=smem, size = 0x4, offset = 0x4, fixed_abs, tag = 'smem constant byte address 0x4 - core index']
  #allocation1 [shape = 'u32[144,128]{1,0:T(1,128)}', space=vmem, size = 0x12000, scoped, tag = 'internal scratch']
  %s0 = inlined_call_operand.vmem [shape: f32[10], index: 0, kind: input, shape index: {}]
  %s1 = inlined_call_operand.vmem [shape: f32[10,16,128], index: 1, kind: input, shape index: {}]
  %s2 = inlined_call_operand.vmem [shape: s8[16,128], index: 2, kind: input, shape index: {}]
  %s3 = inlined_call_operand.vmem [shape: s8[16,128], index: 3, kind: input, shape index: {}]
  %s4 = inlined_call_operand.vmem [shape: f32[2,1,8,128], index: 4, kind: output, shape index: {}]
  %s5 = sld [smem:[#allocation0]]
  $region91: #{_masked_cross_entropy_impl.1} parent=0
    _
  %s7 = ssub.s32 1, %s5
  %s8 = scalar_select 0, %s7, %s5
  $region1: #{_masked_cross_entropy_impl.1} parent=0
    #allocation2 [shape = 'u8[512]{0}', space=smem, size = 0x200, scoped, tag = 'input window, operand 0, single buffered']
    #allocation3 [shape = 's32[2]{0}', space=sflag, size = 0x8, scoped, tag = 'scoped memory for _masked_cross_entropy_impl.1']
    #allocation4 [shape = 'u8[81920]{0}', space=vmem, size = 0x14000, scoped, tag = 'input window, operand 1']
    %9 = vsyncpa [#allocation3], 0
    loop: start=0, step=1, limit=4
    $region2: #{_masked_cross_entropy_impl.1} parent=1 // loop_pre_header
      _
    $region3: #{_masked_cross_entropy_impl.1} parent=1 // loop_header
      %s11 = sphi 0, %s15
      %p12 = scmp.ge.s32.totalorder %s11, 4
      %s18 = sphi 0, %s30
      %s19 = sphi 0, %s26
      %s20 = sphi 0, %s18
      %s21 = sphi 0, %s19
      %s22 = sphi 0, %s20
      %s23 = sphi 0, %s21
      %s31 = sphi 0, %s31
      %s33 = sphi 0, %s31
      %s34 = sphi 0, %s33
      %s48 = sphi 0, %s34
      %s56 = sphi 0, %s58
      %s59 = sphi 0, %s56
      %s60 = sphi 0, %s59
      %s76 = sphi 0, %s60
      %s84 = sphi 0, %s86
      %s87 = sphi 0, %s84
      %s88 = sphi 0, %s87
      %s104 = sphi 0, %s88
      %s112 = sphi 0, %s114
      %s115 = sphi 0, %s112
      %s116 = sphi 0, %s115
      %s132 = sphi 0, %s116
      %s140 = sphi 0, %s142
      %s143 = sphi 0, %s140
      %s144 = sphi 0, %s143
      %s160 = sphi 0, %s144
    $region4: #{_masked_cross_entropy_impl.1} parent=1 // loop_header_branch
      %14 = sbr.rel (%p12) target = $region8
    $region5: #{_masked_cross_entropy_impl.1} parent=1 // loop_body
      %s16 = ssub.s32 %s11, 1
      %s17 = ssub.s32 %s11, 2
      %s24 = sadd.s32 1, %s19
      %p25 = scmp.ge.s32.totalorder %s24, 1
      %s26 = scalar_select %p25, 0, %s24
      %s27 = sadd.s32 1, %s18
      %s28 = scalar_select %p25, %s27, %s18
      %p29 = scmp.ge.s32.totalorder %s28, 2
      %s30 = scalar_select %p29, 0, %s28
      %s32 = sadd.s32 %s31, 1
      %p35 = scmp.eq.s32.totalorder %s11, 1
      %p36 = scmp.ne.s32.totalorder %s31, %s33
      %p37 = scmp.eq.s32.totalorder %s11, 0
      %p38 = por %p36, %p37
      %p39 = scmp.ne.s32.totalorder %s31, %s33
      %p40 = scmp.eq.s32.totalorder %s16, 1
      %p41 = por %p39, %p40
      %p42 = scmp.ne.s32.totalorder %s33, %s34
      %p43 = scmp.eq.s32.totalorder %s16, 0
      %p44 = por %p42, %p43
      %p45 = scmp.ne.s32.totalorder %s33, %s34
      %p46 = scmp.eq.s32.totalorder %s17, 1
      %p47 = por %p45, %p46
      %p49 = scmp.ne.s32.totalorder %s34, %s48
      %p50 = scmp.eq.s32.totalorder %s17, 0
      %p51 = por %p49, %p50
      %s52 = ssub.s32 %s18, %s30
      %s53 = ssub.s32 %s19, %s26
      %s54 = sor.u32 %s52, %s53
      %p55 = scmp.eq.s32.totalorder %s54, 0
      %s57 = sadd.s32 %s56, 1
      %s58 = scalar_select %p55, %s56, %s57
      %p61 = pneg %p55
      %p62 = scmp.eq.s32.totalorder %s11, 1
      %p63 = por %p61, %p62
      %p64 = scmp.ne.s32.totalorder %s56, %s59
      %p65 = scmp.eq.s32.totalorder %s11, 0
      %p66 = por %p64, %p65
      %p67 = scmp.ne.s32.totalorder %s56, %s59
      %p68 = scmp.eq.s32.totalorder %s16, 1
      %p69 = por %p67, %p68
      %p70 = scmp.ne.s32.totalorder %s59, %s60
      %p71 = scmp.eq.s32.totalorder %s16, 0
      %p72 = por %p70, %p71
      %p73 = scmp.ne.s32.totalorder %s59, %s60
      %p74 = scmp.eq.s32.totalorder %s17, 1
      %p75 = por %p73, %p74
      %p77 = scmp.ne.s32.totalorder %s60, %s76
      %p78 = scmp.eq.s32.totalorder %s17, 0
      %p79 = por %p77, %p78
      %s80 = ssub.s32 %s18, %s30
      %s81 = ssub.s32 %s19, %s26
      %s82 = sor.u32 %s80, %s81
      %p83 = scmp.eq.s32.totalorder %s82, 0
      %s85 = sadd.s32 %s84, 1
      %s86 = scalar_select %p83, %s84, %s85
      %p89 = pneg %p83
      %p90 = scmp.eq.s32.totalorder %s11, 1
      %p91 = por %p89, %p90
      %p92 = scmp.ne.s32.totalorder %s84, %s87
      %p93 = scmp.eq.s32.totalorder %s11, 0
      %p94 = por %p92, %p93
      %p95 = scmp.ne.s32.totalorder %s84, %s87
      %p96 = scmp.eq.s32.totalorder %s16, 1
      %p97 = por %p95, %p96
      %p98 = scmp.ne.s32.totalorder %s87, %s88
      %p99 = scmp.eq.s32.totalorder %s16, 0
      %p100 = por %p98, %p99
      %p101 = scmp.ne.s32.totalorder %s87, %s88
      %p102 = scmp.eq.s32.totalorder %s17, 1
      %p103 = por %p101, %p102
      %p105 = scmp.ne.s32.totalorder %s88, %s104
      %p106 = scmp.eq.s32.totalorder %s17, 0
      %p107 = por %p105, %p106
      %s108 = ssub.s32 %s18, %s30
      %s109 = ssub.s32 %s19, %s26
      %s110 = sor.u32 %s108, %s109
      %p111 = scmp.eq.s32.totalorder %s110, 0
      %s113 = sadd.s32 %s112, 1
      %s114 = scalar_select %p111, %s112, %s113
      %p117 = pneg %p111
      %p118 = scmp.eq.s32.totalorder %s11, 1
      %p119 = por %p117, %p118
      %p120 = scmp.ne.s32.totalorder %s112, %s115
      %p121 = scmp.eq.s32.totalorder %s11, 0
      %p122 = por %p120, %p121
      %p123 = scmp.ne.s32.totalorder %s112, %s115
      %p124 = scmp.eq.s32.totalorder %s16, 1
      %p125 = por %p123, %p124
      %p126 = scmp.ne.s32.totalorder %s115, %s116
      %p127 = scmp.eq.s32.totalorder %s16, 0
      %p128 = por %p126, %p127
      %p129 = scmp.ne.s32.totalorder %s115, %s116
      %p130 = scmp.eq.s32.totalorder %s17, 1
      %p131 = por %p129, %p130
      %p133 = scmp.ne.s32.totalorder %s116, %s132
      %p134 = scmp.eq.s32.totalorder %s17, 0
      %p135 = por %p133, %p134
      %s136 = ssub.s32 %s18, %s30
      %s137 = ssub.s32 %s19, %s26
      %s138 = sor.u32 %s136, %s137
      %p139 = scmp.eq.s32.totalorder %s138, 0
      %s141 = sadd.s32 %s140, 1
      %s142 = scalar_select %p139, %s140, %s141
      %p145 = pneg %p139
      %p146 = scmp.eq.s32.totalorder %s11, 1
      %p147 = por %p145, %p146
      %p148 = scmp.ne.s32.totalorder %s140, %s143
      %p149 = scmp.eq.s32.totalorder %s11, 0
      %p150 = por %p148, %p149
      %p151 = scmp.ne.s32.totalorder %s140, %s143
      %p152 = scmp.eq.s32.totalorder %s16, 1
      %p153 = por %p151, %p152
      %p154 = scmp.ne.s32.totalorder %s143, %s144
      %p155 = scmp.eq.s32.totalorder %s16, 0
      %p156 = por %p154, %p155
      %p157 = scmp.ne.s32.totalorder %s143, %s144
      %p158 = scmp.eq.s32.totalorder %s17, 1
      %p159 = por %p157, %p158
      %p161 = scmp.ne.s32.totalorder %s144, %s160
      %p162 = scmp.eq.s32.totalorder %s17, 0
      %p163 = por %p161, %p162
      %p164 = scmp.le.s32.totalorder 1, %s11
      %p165 = scmp.lt.s32.totalorder %s11, 3
      %p166 = pnand %p164, %p165
      %p167 = pneg %p166
      // Predicated region
      $region9: #{_masked_cross_entropy_impl.1} parent=5 // pred_check
        _
      $region10: #{_masked_cross_entropy_impl.1} parent=5 // pred_check_branch
        %169 = sbr.rel (%p166) target = $region12
      $region11: #{_masked_cross_entropy_impl.1} parent=5 // pred_region
        %s170 = ssub.s32 %s11, 1
        // Predicated region
        $region13: #{_masked_cross_entropy_impl.1} parent=11 // pred_check
          %p171 = pneg %p44
        $region14: #{_masked_cross_entropy_impl.1} parent=11 // pred_check_branch
          %173 = sbr.rel (%p171) target = $region16
        $region15: #{_masked_cross_entropy_impl.1} parent=11 // pred_region
          %s175 = ssub.s32 16, 16
          %176 = vsyncadd [#allocation3], %s175
          %s178 = sshll.u32 %s0, 4
          %s179 = int_to_ptr.vmem [resolvable:$true] %s178
          %181 = dma.vmem_to_smem %s179, 16, [#allocation2], [#allocation3]
        $region16: #{_masked_cross_entropy_impl.1} parent=11 // pred_fallthru
          _
      $region12: #{_masked_cross_entropy_impl.1} parent=5 // pred_fallthru
        _
      %p182 = scmp.lt.s32.totalorder %s11, 2
      // Predicated region
      $region17: #{_masked_cross_entropy_impl.1} parent=5 // pred_check
        %p183 = pneg %p182
      $region18: #{_masked_cross_entropy_impl.1} parent=5 // pred_check_branch
        %185 = sbr.rel (%p183) target = $region20
      $region19: #{_masked_cross_entropy_impl.1} parent=5 // pred_region
        // Predicated region
        $region21: #{_masked_cross_entropy_impl.1} parent=19 // pred_check
          %p186 = pneg %p66
        $region22: #{_masked_cross_entropy_impl.1} parent=19 // pred_check_branch
          %188 = sbr.rel (%p186) target = $region24
        $region23: #{_masked_cross_entropy_impl.1} parent=19 // pred_region
          %s189 = sand.u32 %s56, 1
          %s190 = sand.u32 %s56, 1
          %s191 = smul.addr %s190, 80
          %s192 = scalar_lea.vmem [#allocation4], %s191
          %s193 = sadd.s32 %s19, %s18
          %s194 = smul.addr %s193, 8
          %s195 = scalar_lea.vmem %s1, %s194
          // Predicated region
          $region25: #{_masked_cross_entropy_impl.1} parent=23 // pred_check
            _
          $region26: #{_masked_cross_entropy_impl.1} parent=23 // pred_check_branch
            %197 = sbr.rel (0) target = $region28
          $region27: #{_masked_cross_entropy_impl.1} parent=23 // pred_region
            // Predicated region
            $region29: #{_masked_cross_entropy_impl.1} parent=27 // pred_check
              _
            $region30: #{_masked_cross_entropy_impl.1} parent=27 // pred_check_branch
              %199 = sbr.rel (0) target = $region32
            $region31: #{_masked_cross_entropy_impl.1} parent=27 // pred_region
              // Predicated region
              $region44: #{_masked_cross_entropy_impl.1} parent=31 // pred_check
                _
              $region45: #{_masked_cross_entropy_impl.1} parent=31 // pred_check_branch
                %233 = sbr.rel (0) target = $region47
              $region46: #{_masked_cross_entropy_impl.1} parent=31 // pred_region
                loop: start=0, step=1, limit=1
                $region48: #{_masked_cross_entropy_impl.1} parent=46 // loop_pre_header
                  _
                $region49: #{_masked_cross_entropy_impl.1} parent=46 // loop_header
                  %s235 = sphi 0, %s239
                  %p236 = scmp.ge.s32.totalorder %s235, 1
                  %s240 = sphi %s195, %s195
                  %s241 = sphi %s192, %s192
                $region50: #{_masked_cross_entropy_impl.1} parent=46 // loop_header_branch
                  %238 = sbr.rel (%p236) target = $region54
                $region51: #{_masked_cross_entropy_impl.1} parent=46 // loop_body
                  %v242 = vld [vmem:[%s240] sm:$0xff]
                  %243 = vst [vmem:[%s241] sm:$0xff] %v242
                  %v244 = vld [vmem:[%s240 + $0x10] sm:$0xff]
                  %245 = vst [vmem:[%s241 + $0x8] sm:$0xff] %v244
                  %v246 = vld [vmem:[%s240 + $0x20] sm:$0xff]
                  %247 = vst [vmem:[%s241 + $0x10] sm:$0xff] %v246
                  %v248 = vld [vmem:[%s240 + $0x30] sm:$0xff]
                  %249 = vst [vmem:[%s241 + $0x18] sm:$0xff] %v248
                  %v250 = vld [vmem:[%s240 + $0x40] sm:$0xff]
                  %251 = vst [vmem:[%s241 + $0x20] sm:$0xff] %v250
                  %v252 = vld [vmem:[%s240 + $0x50] sm:$0xff]
                  %253 = vst [vmem:[%s241 + $0x28] sm:$0xff] %v252
                  %v254 = vld [vmem:[%s240 + $0x60] sm:$0xff]
                  %255 = vst [vmem:[%s241 + $0x30] sm:$0xff] %v254
                  %v256 = vld [vmem:[%s240 + $0x70] sm:$0xff]
                  %257 = vst [vmem:[%s241 + $0x38] sm:$0xff] %v256
                  %v258 = vld [vmem:[%s240 + $0x80] sm:$0xff]
                  %259 = vst [vmem:[%s241 + $0x40] sm:$0xff] %v258
                  %v260 = vld [vmem:[%s240 + $0x90] sm:$0xff]
                  %261 = vst [vmem:[%s241 + $0x48] sm:$0xff] %v260
                $region52: #{_masked_cross_entropy_impl.1} parent=46 // loop_footer
                  %s239 = sadd.s32 1, %s235
                $region53: #{_masked_cross_entropy_impl.1} parent=46 // loop_footer_branch
                  %234 = sbr.rel target = $region49
                $region54: #{_masked_cross_entropy_impl.1} parent=46 // loop_exit
                  _
              $region47: #{_masked_cross_entropy_impl.1} parent=31 // pred_fallthru
                _
              // Predicated region
              $region55: #{_masked_cross_entropy_impl.1} parent=31 // pred_check
                _
              $region56: #{_masked_cross_entropy_impl.1} parent=31 // pred_check_branch
                %263 = sbr.rel target = $region58
              $region57: #{_masked_cross_entropy_impl.1} parent=31 // pred_region
                _
              $region58: #{_masked_cross_entropy_impl.1} parent=31 // pred_fallthru
                _
            $region32: #{_masked_cross_entropy_impl.1} parent=27 // pred_fallthru
              _
            // Predicated region
            $region33: #{_masked_cross_entropy_impl.1} parent=27 // pred_check
              _
            $region34: #{_masked_cross_entropy_impl.1} parent=27 // pred_check_branch
              %201 = sbr.rel target = $region36
            $region35: #{_masked_cross_entropy_impl.1} parent=27 // pred_region
              %s203 = ssub.s32 256, 1
              loop: start=0, step=1, limit=1
              $region37: #{_masked_cross_entropy_impl.1} parent=35 // loop_pre_header
                _
              $region38: #{_masked_cross_entropy_impl.1} parent=35 // loop_header
                %s205 = sphi 0, %s209
                %p206 = scmp.ge.s32.totalorder %s205, 1
                %s210 = sphi %s195, %s195
                %s211 = sphi %s192, %s192
              $region39: #{_masked_cross_entropy_impl.1} parent=35 // loop_header_branch
                %208 = sbr.rel (%p206) target = $region43
              $region40: #{_masked_cross_entropy_impl.1} parent=35 // loop_body
                %v212 = vld [vmem:[%s210] sm:%s203]
                %213 = vst [vmem:[%s211] sm:%s203] %v212
                %v214 = vld [vmem:[%s210 + $0x10] sm:%s203]
                %215 = vst [vmem:[%s211 + $0x8] sm:%s203] %v214
                %v216 = vld [vmem:[%s210 + $0x20] sm:%s203]
                %217 = vst [vmem:[%s211 + $0x10] sm:%s203] %v216
                %v218 = vld [vmem:[%s210 + $0x30] sm:%s203]
                %219 = vst [vmem:[%s211 + $0x18] sm:%s203] %v218
                %v220 = vld [vmem:[%s210 + $0x40] sm:%s203]
                %221 = vst [vmem:[%s211 + $0x20] sm:%s203] %v220
                %v222 = vld [vmem:[%s210 + $0x50] sm:%s203]
                %223 = vst [vmem:[%s211 + $0x28] sm:%s203] %v222
                %v224 = vld [vmem:[%s210 + $0x60] sm:%s203]
                %225 = vst [vmem:[%s211 + $0x30] sm:%s203] %v224
                %v226 = vld [vmem:[%s210 + $0x70] sm:%s203]
                %227 = vst [vmem:[%s211 + $0x38] sm:%s203] %v226
                %v228 = vld [vmem:[%s210 + $0x80] sm:%s203]
                %229 = vst [vmem:[%s211 + $0x40] sm:%s203] %v228
                %v230 = vld [vmem:[%s210 + $0x90] sm:%s203]
                %231 = vst [vmem:[%s211 + $0x48] sm:%s203] %v230
              $region41: #{_masked_cross_entropy_impl.1} parent=35 // loop_footer
                %s209 = sadd.s32 1, %s205
              $region42: #{_masked_cross_entropy_impl.1} parent=35 // loop_footer_branch
                %204 = sbr.rel target = $region38
              $region43: #{_masked_cross_entropy_impl.1} parent=35 // loop_exit
                _
            $region36: #{_masked_cross_entropy_impl.1} parent=27 // pred_fallthru
              _
          $region28: #{_masked_cross_entropy_impl.1} parent=23 // pred_fallthru
            _
          %264 = vnop
        $region24: #{_masked_cross_entropy_impl.1} parent=19 // pred_fallthru
          _
        // Predicated region
        $region59: #{_masked_cross_entropy_impl.1} parent=19 // pred_check
          %p265 = pneg %p94
        $region60: #{_masked_cross_entropy_impl.1} parent=19 // pred_check_branch
          %267 = sbr.rel (%p265) target = $region62
        $region61: #{_masked_cross_entropy_impl.1} parent=19 // pred_region
          %p268 = scmp.lt.s32.totalorder %s18, 1
          %s269 = scalar_select %p268, %s18, 1
          %p270 = scmp.lt.s32.totalorder %s19, 0
          %s271 = scalar_select %p270, %s19, 0
          %s272 = sadd.s32 %s271, %s269
          %s273 = smul.addr %s272, 2
          %s274 = scalar_lea.vmem %s2, %s273
        $region62: #{_masked_cross_entropy_impl.1} parent=19 // pred_fallthru
          _
        // Predicated region
        $region63: #{_masked_cross_entropy_impl.1} parent=19 // pred_check
          %p275 = pneg %p122
        $region64: #{_masked_cross_entropy_impl.1} parent=19 // pred_check_branch
          %277 = sbr.rel (%p275) target = $region66
        $region65: #{_masked_cross_entropy_impl.1} parent=19 // pred_region
          %p278 = scmp.lt.s32.totalorder %s18, 1
          %s279 = scalar_select %p278, %s18, 1
          %p280 = scmp.lt.s32.totalorder %s19, 0
          %s281 = scalar_select %p280, %s19, 0
          %s282 = sadd.s32 %s281, %s279
          %s283 = smul.addr %s282, 2
          %s284 = scalar_lea.vmem %s3, %s283
        $region66: #{_masked_cross_entropy_impl.1} parent=19 // pred_fallthru
          _
      $region20: #{_masked_cross_entropy_impl.1} parent=5 // pred_fallthru
        _
      %p285 = scmp.le.s32.totalorder 1, %s11
      %p286 = scmp.lt.s32.totalorder %s11, 3
      %p287 = pnand %p285, %p286
      %p288 = pneg %p287
      // Predicated region
      $region67: #{_masked_cross_entropy_impl.1} parent=5 // pred_check
        _
      $region68: #{_masked_cross_entropy_impl.1} parent=5 // pred_check_branch
        %290 = sbr.rel (%p287) target = $region70
      $region69: #{_masked_cross_entropy_impl.1} parent=5 // pred_region
        %s291 = ssub.s32 %s11, 1
        // Predicated region
        $region71: #{_masked_cross_entropy_impl.1} parent=69 // pred_check
          %p292 = pneg %p44
        $region72: #{_masked_cross_entropy_impl.1} parent=69 // pred_check_branch
          %294 = sbr.rel (%p292) target = $region74
        $region73: #{_masked_cross_entropy_impl.1} parent=69 // pred_region
          %295 = dma.done [#allocation3], 16
        $region74: #{_masked_cross_entropy_impl.1} parent=69 // pred_fallthru
          _
        %s296 = sand.u32 %s59, 1
        %s297 = sand.u32 %s59, 1
        %s298 = smul.addr %s297, 80
        %s299 = scalar_lea.vmem [#allocation4], %s298
        // Predicated region
        $region75: #{_masked_cross_entropy_impl.1} parent=69 // pred_check
          %p300 = pneg %p72
        $region76: #{_masked_cross_entropy_impl.1} parent=69 // pred_check_branch
          %302 = sbr.rel (%p300) target = $region78
        $region77: #{_masked_cross_entropy_impl.1} parent=69 // pred_region
          _
        $region78: #{_masked_cross_entropy_impl.1} parent=69 // pred_fallthru
          _
        %303 = sfence
        %p304 = pneg %p44
        %p305 = pneg %p41
        %s306 = sand.u32 %s59, 1
        %s307 = sand.u32 %s59, 1
        %s308 = smul.addr %s307, 80
        %s309 = scalar_lea.vmem [#allocation4], %s308
        %p310 = pneg %p72
        %p311 = pneg %p69
        %p312 = scmp.lt.s32.totalorder %s20, 1
        %s313 = scalar_select %p312, %s20, 1
        %p314 = scmp.lt.s32.totalorder %s21, 0
        %s315 = scalar_select %p314, %s21, 0
        %s316 = sadd.s32 %s315, %s313
        %s317 = smul.addr %s316, 2
        %s318 = scalar_lea.vmem %s2, %s317
        %p319 = pneg %p100
        %p320 = pneg %p97
        %p321 = scmp.lt.s32.totalorder %s20, 1
        %s322 = scalar_select %p321, %s20, 1
        %p323 = scmp.lt.s32.totalorder %s21, 0
        %s324 = scalar_select %p323, %s21, 0
        %s325 = sadd.s32 %s324, %s322
        %s326 = smul.addr %s325, 2
        %s327 = scalar_lea.vmem %s3, %s326
        %p328 = pneg %p128
        %p329 = pneg %p125
        %p330 = pneg %p156
        %p331 = pneg %p153
        %p332 = scmp.lt.s32.totalorder %s20, 1
        %s333 = scalar_select %p332, %s20, 1
        %p334 = scmp.lt.s32.totalorder %s21, 0
        %s335 = scalar_select %p334, %s21, 0
        %s336 = sadd.s32 %s335, %s333
        %s337 = smul.addr %s336, 8
        %s338 = scalar_lea.vmem %s4, %s337
        %p339 = scmp.lt.s32.totalorder %s20, 1
        %s340 = scalar_select %p339, %s20, 1
        %p341 = scmp.lt.s32.totalorder %s21, 0
        %s342 = scalar_select %p341, %s21, 0
        %s343 = sadd.s32 %s342, %s340
        %s344 = smul.addr %s343, 2
        %s345 = scalar_lea.vmem %s2, %s344
        %p346 = scmp.lt.s32.totalorder %s20, 1
        %s347 = scalar_select %p346, %s20, 1
        %p348 = scmp.lt.s32.totalorder %s21, 0
        %s349 = scalar_select %p348, %s21, 0
        %s350 = sadd.s32 %s349, %s347
        %s351 = smul.addr %s350, 2
        %s352 = scalar_lea.vmem %s3, %s351
        %p353 = scmp.lt.s32.totalorder %s20, 1
        %s354 = scalar_select %p353, %s20, 1
        %p355 = scmp.lt.s32.totalorder %s21, 0
        %s356 = scalar_select %p355, %s21, 0
        %s357 = sadd.s32 %s356, %s354
        %s358 = smul.addr %s357, 8
        %s359 = scalar_lea.vmem %s4, %s358
        %s360 = smul.u32 %s20, 8
        %s361 = smul.u32 %s21, 128
        %s362 = sld [smem:[#allocation2]]
        %s363 = ssub.f32 %s362, 1.0
        %s364 = sld [smem:[#allocation2 + $0x1]]
        %s365 = ssub.f32 %s364, 1.0
        %s366 = sld [smem:[#allocation2 + $0x2]]
        %s367 = ssub.f32 %s366, 1.0
        %s368 = sld [smem:[#allocation2 + $0x3]]
        %s369 = ssub.f32 %s368, 1.0
        %s370 = sld [smem:[#allocation2 + $0x4]]
        %s371 = ssub.f32 %s370, 1.0
        %s372 = sld [smem:[#allocation2 + $0x5]]
        %s373 = ssub.f32 %s372, 1.0
        %s374 = sld [smem:[#allocation2 + $0x6]]
        %s375 = ssub.f32 %s374, 1.0
        %s376 = sld [smem:[#allocation2 + $0x7]]
        %s377 = ssub.f32 %s376, 1.0
        %s378 = sld [smem:[#allocation2 + $0x8]]
        %s379 = ssub.f32 %s378, 1.0
        %s380 = sld [smem:[#allocation2 + $0x9]]
        %s381 = ssub.f32 %s380, 1.0
        %v382 = vld [vmem:[%s345] sm:$0x3]
        %v383 = vunpack.c.0.s8 %v382
        %v384 = vld [vmem:[%s352] sm:$0x3]
        %v385 = vunpack.c.0.s8 %v384
        %v386 = vcvt.s32.f32 %v385
        %v387 = vld [vmem:[%s299] sm:$0xff]
        %s388 = sadd.s32 0, 8
        %s389 = scalar_lea.vmem %s299, %s388 [#allocation4]
        %v390 = vld [vmem:[%s389] sm:$0xff]
        %v391 = vmax.f32 %v387, %v390
        %s392 = sadd.s32 0, 16
        %s393 = scalar_lea.vmem %s299, %s392 [#allocation4]
        %v394 = vld [vmem:[%s393] sm:$0xff]
        %v395 = vmax.f32 %v391, %v394
        %s396 = sadd.s32 0, 24
        %s397 = scalar_lea.vmem %s299, %s396 [#allocation4]
        %v398 = vld [vmem:[%s397] sm:$0xff]
        %v399 = vmax.f32 %v395, %v398
        %s400 = sadd.s32 0, 32
        %s401 = scalar_lea.vmem %s299, %s400 [#allocation4]
        %v402 = vld [vmem:[%s401] sm:$0xff]
        %v403 = vmax.f32 %v399, %v402
        %s404 = sadd.s32 0, 40
        %s405 = scalar_lea.vmem %s299, %s404 [#allocation4]
        %v406 = vld [vmem:[%s405] sm:$0xff]
        %v407 = vmax.f32 %v403, %v406
        %s408 = sadd.s32 0, 48
        %s409 = scalar_lea.vmem %s299, %s408 [#allocation4]
        %v410 = vld [vmem:[%s409] sm:$0xff]
        %v411 = vmax.f32 %v407, %v410
        %s412 = sadd.s32 0, 56
        %s413 = scalar_lea.vmem %s299, %s412 [#allocation4]
        %v414 = vld [vmem:[%s413] sm:$0xff]
        %v415 = vmax.f32 %v411, %v414
        %s416 = sadd.s32 0, 64
        %s417 = scalar_lea.vmem %s299, %s416 [#allocation4]
        %v418 = vld [vmem:[%s417] sm:$0xff]
        %v419 = vmax.f32 %v415, %v418
        %s420 = sadd.s32 0, 72
        %s421 = scalar_lea.vmem %s299, %s420 [#allocation4]
        %v422 = vld [vmem:[%s421] sm:$0xff]
        %v423 = vmax.f32 %v419, %v422
        %v424 = vsub.f32 %v387, %v423
        %v425 = vmul.f32 %v424, 1.442695
        %v426 = vpow.pop %v425
        %v427 = vadd.f32 %v426, 0.0
        %vm428 = vcmp.eq.s32.totalorder %v383, 0
        %v429 = vsel %vm428, %v387, 0.0
        %v430 = vstv %s363
        %v431 = vsel %vm428, %v430, 0.0
        %v432 = vsub.f32 %v390, %v423
        %v433 = vmul.f32 %v432, 1.442695
        %v434 = vpow.pop %v433
        %v435 = vadd.f32 %v427, %v434
        %vm436 = vcmp.eq.s32.totalorder %v383, 1
        %v437 = vsel %vm436, %v390, %v429
        %v438 = vstv %s365
        %v439 = vsel %vm436, %v438, %v431
        %v440 = vsub.f32 %v394, %v423
        %v441 = vmul.f32 %v440, 1.442695
        %v442 = vpow.pop %v441
        %v443 = vadd.f32 %v435, %v442
        %vm444 = vcmp.eq.s32.totalorder %v383, 2
        %v445 = vsel %vm444, %v394, %v437
        %v446 = vstv %s367
        %v447 = vsel %vm444, %v446, %v439
        %v448 = vsub.f32 %v398, %v423
        %v449 = vmul.f32 %v448, 1.442695
        %v450 = vpow.pop %v449
        %v451 = vadd.f32 %v443, %v450
        %vm452 = vcmp.eq.s32.totalorder %v383, 3
        %v453 = vsel %vm452, %v398, %v445
        %v454 = vstv %s369
        %v455 = vsel %vm452, %v454, %v447
        %v456 = vsub.f32 %v402, %v423
        %v457 = vmul.f32 %v456, 1.442695
        %v458 = vpow.pop %v457
        %v459 = vadd.f32 %v451, %v458
        %vm460 = vcmp.eq.s32.totalorder %v383, 4
        %v461 = vsel %vm460, %v402, %v453
        %v462 = vstv %s371
        %v463 = vsel %vm460, %v462, %v455
        %v464 = vsub.f32 %v406, %v423
        %v465 = vmul.f32 %v464, 1.442695
        %v466 = vpow.pop %v465
        %v467 = vadd.f32 %v459, %v466
        %vm468 = vcmp.eq.s32.totalorder %v383, 5
        %v469 = vsel %vm468, %v406, %v461
        %v470 = vstv %s373
        %v471 = vsel %vm468, %v470, %v463
        %v472 = vsub.f32 %v410, %v423
        %v473 = vmul.f32 %v472, 1.442695
        %v474 = vpow.pop %v473
        %v475 = vadd.f32 %v467, %v474
        %vm476 = vcmp.eq.s32.totalorder %v383, 6
        %v477 = vsel %vm476, %v410, %v469
        %v478 = vstv %s375
        %v479 = vsel %vm476, %v478, %v471
        %v480 = vsub.f32 %v414, %v423
        %v481 = vmul.f32 %v480, 1.442695
        %v482 = vpow.pop %v481
        %v483 = vadd.f32 %v475, %v482
        %vm484 = vcmp.eq.s32.totalorder %v383, 7
        %v485 = vsel %vm484, %v414, %v477
        %v486 = vstv %s377
        %v487 = vsel %vm484, %v486, %v479
        %v488 = vsub.f32 %v418, %v423
        %v489 = vmul.f32 %v488, 1.442695
        %v490 = vpow.pop %v489
        %v491 = vadd.f32 %v483, %v490
        %vm492 = vcmp.eq.s32.totalorder %v383, 8
        %v493 = vsel %vm492, %v418, %v485
        %v494 = vstv %s379
        %v495 = vsel %vm492, %v494, %v487
        %v496 = vsub.f32 %v422, %v423
        %v497 = vmul.f32 %v496, 1.442695
        %v498 = vpow.pop %v497
        %v499 = vadd.f32 %v491, %v498
        %vm500 = vcmp.eq.s32.totalorder %v383, 9
        %v501 = vsel %vm500, %v422, %v493
        %v502 = vstv %s381
        %v503 = vsel %vm500, %v502, %v495
        %v504 = vlog2.pop %v499
        %v505 = vmul.f32 %v504, 0.6931472
        %v506 = vadd.f32 %v505, %v423
        %v507 = vsub.f32 %v506, %v501
        %v508 = vlaneseq
        %v509 = vshrl.u32 %v508, 7
        %s510 = sadd.s32 %s360, 0
        %v511 = vstv %s510
        %v512 = vadd.s32 %v509, %v511
        %v513 = vlaneseq
        %v514 = vand.u32 %v513, 127
        %v515 = vstv %s361
        %v516 = vadd.s32 %v514, %v515
        %v517 = vsub.s32 %v512, %v516
        %vm518 = vcmp.lt.s32.totalorder %v517, 0
        %v519 = vsub.s32 0, %v517
        %v520 = vsel %vm518, %v519, %v517
        %vm521 = vcmp.ge.s32.totalorder %v520, 4
        %v522 = vsel %vm521, 1, 0
        %v523 = vcvt.s32.f32 %v522
        %v524 = vmul.f32 %v503, %v523
        %v525 = vadd.f32 %v524, 1.0
        %v526 = vmul.f32 %v525, %v386
        %v527 = vmul.f32 %v507, %v526
        %v528 = vadd.f32 %v527, 0.0
        %529 = vst [vmem:[%s359] sm:$0xff] %v528
        %p530 = scmp.lt.s32.totalorder %s20, 1
        %s531 = scalar_select %p530, %s20, 1
        %p532 = scmp.lt.s32.totalorder %s21, 0
        %s533 = scalar_select %p532, %s21, 0
        %s534 = sadd.s32 %s533, %s531
        %s535 = smul.addr %s534, 8
        %s536 = scalar_lea.vmem %s4, %s535
        // Predicated region
        $region79: #{_masked_cross_entropy_impl.1} parent=69 // pred_check
          %p537 = pneg %p153
        $region80: #{_masked_cross_entropy_impl.1} parent=69 // pred_check_branch
          %539 = sbr.rel (%p537) target = $region82
        $region81: #{_masked_cross_entropy_impl.1} parent=69 // pred_region
          _
        $region82: #{_masked_cross_entropy_impl.1} parent=69 // pred_fallthru
          _
      $region70: #{_masked_cross_entropy_impl.1} parent=5 // pred_fallthru
        _
      %p540 = scmp.le.s32.totalorder 2, %s11
      // Predicated region
      $region83: #{_masked_cross_entropy_impl.1} parent=5 // pred_check
        %p541 = pneg %p540
      $region84: #{_masked_cross_entropy_impl.1} parent=5 // pred_check_branch
        %543 = sbr.rel (%p541) target = $region86
      $region85: #{_masked_cross_entropy_impl.1} parent=5 // pred_region
        %s544 = ssub.s32 %s11, 2
        // Predicated region
        $region87: #{_masked_cross_entropy_impl.1} parent=85 // pred_check
          %p545 = pneg %p159
        $region88: #{_masked_cross_entropy_impl.1} parent=85 // pred_check_branch
          %547 = sbr.rel (%p545) target = $region90
        $region89: #{_masked_cross_entropy_impl.1} parent=85 // pred_region
          %p548 = scmp.lt.s32.totalorder %s22, 1
          %s549 = scalar_select %p548, %s22, 1
          %p550 = scmp.lt.s32.totalorder %s23, 0
          %s551 = scalar_select %p550, %s23, 0
          %s552 = sadd.s32 %s551, %s549
          %s553 = smul.addr %s552, 8
          %s554 = scalar_lea.vmem %s4, %s553
        $region90: #{_masked_cross_entropy_impl.1} parent=85 // pred_fallthru
          _
      $region86: #{_masked_cross_entropy_impl.1} parent=5 // pred_fallthru
        _
    $region6: #{_masked_cross_entropy_impl.1} parent=1 // loop_footer
      %s15 = sadd.s32 1, %s11
    $region7: #{_masked_cross_entropy_impl.1} parent=1 // loop_footer_branch
      %10 = sbr.rel target = $region3
    $region8: #{_masked_cross_entropy_impl.1} parent=1 // loop_exit
      _
    %555 = vsyncpa [#allocation3], 1
    %s556 = scalar_lea.sflag [#allocation3], 1
    %557 = vsyncpa %s556, 1

</llo_original>
